<compile_context>
chip_gen: v7x
topology: tpu7x:2x2x1
jax: 0.10.0
libtpu: 0.0.40
codegen_flags: <defaults>
</compile_context>

<pallas_src>
import functools

import numpy as np
import jax
import jax.numpy as jnp
from jax.experimental import pallas as pl
from jax.experimental.pallas import tpu as pltpu


# ----------------------------- Pallas kernel ------------------------------ #

def gather_candidate_samples(data_flat, sample_ids):
    """Return data_flat[sample_ids] via a batched manual-DMA gather kernel.

    data_flat:  (N, F) float32 — lane-dense flattened samples (F % 128 == 0),
                left in HBM (memory_space=pl.ANY).
    sample_ids: (B,) int32     — resolved sample indices (candidates[idx]),
                scalar-prefetched into SMEM.
    """
    N, F = data_flat.shape
    B = int(sample_ids.shape[0])

    def kernel(sid_ref, data_hbm, out_hbm, copy_sems):
        # Pure DMA gather: start all B HBM->HBM copies so they are in flight
        # concurrently, then wait them all.  No VMEM staging, no vector body.
        # TODO(synk): for very large B, cap the number of in-flight copies
        # (chunked start/wait) instead of allocating B semaphores.
        for i in range(B):
            pltpu.make_async_copy(
                data_hbm.at[sid_ref[i]], out_hbm.at[i], copy_sems.at[i]
            ).start()
        for i in range(B):
            pltpu.make_async_copy(
                data_hbm.at[sid_ref[i]], out_hbm.at[i], copy_sems.at[i]
            ).wait()

    grid_spec = pltpu.PrefetchScalarGridSpec(
        num_scalar_prefetch=1,                     # sample ids -> SMEM
        grid=(1,),                                 # single step: all gathers at once
        in_specs=[pl.BlockSpec(memory_space=pl.ANY)],   # raw HBM data ref
        out_specs=pl.BlockSpec(memory_space=pl.ANY),    # raw HBM output ref
        scratch_shapes=[pltpu.SemaphoreType.DMA((B,))],  # one sem per copy
    )

    return pl.pallas_call(
        kernel,
        out_shape=jax.ShapeDtypeStruct((B, F), data_flat.dtype),
        grid_spec=grid_spec,
        compiler_params=pltpu.CompilerParams(
            dimension_semantics=("arbitrary",)),
    )(sample_ids, data_flat)


# ----------------------------- jitted hot path ----------------------------- #

@functools.partial(jax.jit, static_argnames=("batch", "sample_shape"))
def _sample_and_gather(data_flat, candidates, key, *, batch, sample_shape):
    # np.random.randint(len(candidates)) -> deterministic jax.random draw(s)
    idx = jax.random.randint(key, (batch,), 0, candidates.shape[0],
                             dtype=jnp.int32)
    sample_ids = jnp.take(candidates, idx, axis=0).astype(jnp.int32)
    flat = gather_candidate_samples(data_flat, sample_ids)          # (B, F)
    feat = int(np.prod(sample_shape))
    imgs = flat[:, :feat].reshape((batch,) + sample_shape)
    return imgs, sample_ids


# --------------------------- module equivalent ----------------------------- #

class OutlierExposureJAX:
    """JAX/Pallas equivalent of the PyTorch OutlierExposure module."""

    def __init__(self, images, targets, known_anomaly, obs_ratio=0.1, *, key,
                 batch_size=32):
        # images: (N, C, H, W) float32, targets: (N,) int32
        N = images.shape[0]
        self._sample_shape = tuple(int(d) for d in images.shape[1:])
        self._batch_size = int(batch_size)

        # lane-dense storage: (N, F) with F = feat padded to a multiple of 128,
        # so one sample is one long contiguous DMA (widest possible last dim).
        feat = int(np.prod(self._sample_shape))
        padded = ((feat + 127) // 128) * 128
        flat = images.reshape(N, feat)
        if padded != feat:
            flat = jnp.pad(flat, ((0, 0), (0, padded - feat)))
        self._data_flat = flat                                      # (N, F)

        candidates = np.nonzero(np.asarray(targets) == known_anomaly)[0]
        if candidates.size == 0:
            raise ValueError("no samples with the requested known_anomaly label")
        # TODO(synk): candidate subsampling uses jax.random.permutation, not
        # torch's RNG, so the selected subset differs for the same seed.
        perm_key, self._fwd_key = jax.random.split(key)
        perm = np.asarray(jax.random.permutation(perm_key, candidates.size))
        n_keep = max(1, int(candidates.size * obs_ratio))   # guard n_keep >= 1
        self.candidates = jnp.asarray(candidates[perm[:n_keep]], dtype=jnp.int32)

    def _draw(self, batch):
        self._fwd_key, sub = jax.random.split(self._fwd_key)
        return _sample_and_gather(self._data_flat, self.candidates, sub,
                                  batch=batch, sample_shape=self._sample_shape)

    def forward(self):
        # PyTorch forward(): one random candidate image, (C, H, W)
        imgs, _ = self._draw(batch=1)
        return imgs[0]

    def forward_batch(self, batch_size=None):
        # Batched variant (amortizes launch overhead across B concurrent DMAs).
        b = self._batch_size if batch_size is None else int(batch_size)
        return self._draw(batch=b)


# --------------------------------- main ------------------------------------ #

if __name__ == "__main__":
    key = jax.random.PRNGKey(0)
    k_img, k_tgt, k_mod = jax.random.split(key, 3)

    N, C, H, W = 64, 4, 16, 16
    NUM_CLASSES = 4
    KNOWN_ANOMALY = 1
    OBS_RATIO = 0.25
    BATCH = 8

    images = jax.random.normal(k_img, (N, C, H, W), dtype=jnp.float32)
    targets = jax.random.randint(k_tgt, (N,), 0, NUM_CLASSES, dtype=jnp.int32)
    # guarantee a deterministic, non-empty candidate pool for the demo
    targets = targets.at[::4].set(KNOWN_ANOMALY)

    oe = OutlierExposureJAX(images, targets, KNOWN_ANOMALY, OBS_RATIO,
                            key=k_mod, batch_size=BATCH)

    # single-sample forward (PyTorch semantics)
    single = jax.block_until_ready(oe.forward())
    assert single.shape == (C, H, W) and single.dtype == jnp.float32

    # batched forward + correctness check against plain-JAX gather
    batch_out, sample_ids = oe.forward_batch(BATCH)
    batch_out = jax.block_until_ready(batch_out)
    sample_ids = jax.block_until_ready(sample_ids)
    assert batch_out.shape == (BATCH, C, H, W)

    ref = np.asarray(images)[np.asarray(sample_ids)]
    np.testing.assert_array_equal(np.asarray(batch_out), ref)
    assert np.all(np.isin(np.asarray(sample_ids), np.asarray(oe.candidates)))

    print("KERNEL_OK")
</pallas_src>

<mosaic_0001>
module attributes {stable_mosaic.version = 11 : i64} {
  func.func @kernel(%arg0: i32, %arg1: memref<1xi32, #tpu.memory_space<smem>>, %arg2: memref<64x1024xf32, #tpu.memory_space<any>>, %arg3: memref<1x1024xf32, #tpu.memory_space<any>>, %arg4: memref<1x!tpu.dma_semaphore, #tpu.memory_space<semaphore_mem>>) attributes {dimension_semantics = [#tpu.dimension_semantics<arbitrary>], iteration_bounds = array<i64: 1>, scalar_prefetch = 1 : i64, scratch_operands = 1 : i64, tpu.core_type = #tpu.core_type<tc>, window_params = [{}, {}]} {
    %c0 = arith.constant 0 : index
    %0 = memref.load %arg1[%c0] : memref<1xi32, #tpu.memory_space<smem>>
    %c0_i32 = arith.constant 0 : i32
    %c0_i32_0 = arith.constant 0 : i32
    %c0_i32_1 = arith.constant 0 : i32
    %1 = tpu.memref_slice %arg2[%0, %c0_i32_1] : memref<64x1024xf32, #tpu.memory_space<any>> -> memref<1x1024xf32, #tpu.memory_space<any>>
    %2 = tpu.memref_squeeze %1 : memref<1x1024xf32, #tpu.memory_space<any>> -> memref<1024xf32, #tpu.memory_space<any>>
    %c0_i32_2 = arith.constant 0 : i32
    %3 = tpu.memref_slice %arg3[%c0_i32, %c0_i32_2] : memref<1x1024xf32, #tpu.memory_space<any>> -> memref<1x1024xf32, #tpu.memory_space<any>>
    %4 = tpu.memref_squeeze %3 : memref<1x1024xf32, #tpu.memory_space<any>> -> memref<1024xf32, #tpu.memory_space<any>>
    %5 = tpu.memref_slice %arg4[%c0_i32_0] : memref<1x!tpu.dma_semaphore, #tpu.memory_space<semaphore_mem>> -> memref<1x!tpu.dma_semaphore, #tpu.memory_space<semaphore_mem>>
    %6 = tpu.memref_squeeze %5 : memref<1x!tpu.dma_semaphore, #tpu.memory_space<semaphore_mem>> -> memref<!tpu.dma_semaphore, #tpu.memory_space<semaphore_mem>>
    tpu.enqueue_dma source(%2 : memref<1024xf32, #tpu.memory_space<any>>) target(%4 : memref<1024xf32, #tpu.memory_space<any>>) target_semaphore(%6 : memref<!tpu.dma_semaphore, #tpu.memory_space<semaphore_mem>>)
    %c0_3 = arith.constant 0 : index
    %7 = memref.load %arg1[%c0_3] : memref<1xi32, #tpu.memory_space<smem>>
    %c0_i32_4 = arith.constant 0 : i32
    %c0_i32_5 = arith.constant 0 : i32
    %c0_i32_6 = arith.constant 0 : i32
    %8 = tpu.memref_slice %arg2[%7, %c0_i32_6] : memref<64x1024xf32, #tpu.memory_space<any>> -> memref<1x1024xf32, #tpu.memory_space<any>>
    %9 = tpu.memref_squeeze %8 : memref<1x1024xf32, #tpu.memory_space<any>> -> memref<1024xf32, #tpu.memory_space<any>>
    %c0_i32_7 = arith.constant 0 : i32
    %10 = tpu.memref_slice %arg3[%c0_i32_4, %c0_i32_7] : memref<1x1024xf32, #tpu.memory_space<any>> -> memref<1x1024xf32, #tpu.memory_space<any>>
    %11 = tpu.memref_squeeze %10 : memref<1x1024xf32, #tpu.memory_space<any>> -> memref<1024xf32, #tpu.memory_space<any>>
    %12 = tpu.memref_slice %arg4[%c0_i32_5] : memref<1x!tpu.dma_semaphore, #tpu.memory_space<semaphore_mem>> -> memref<1x!tpu.dma_semaphore, #tpu.memory_space<semaphore_mem>>
    %13 = tpu.memref_squeeze %12 : memref<1x!tpu.dma_semaphore, #tpu.memory_space<semaphore_mem>> -> memref<!tpu.dma_semaphore, #tpu.memory_space<semaphore_mem>>
    tpu.wait_dma2 semaphore(%13 : memref<!tpu.dma_semaphore, #tpu.memory_space<semaphore_mem>>) src(%9 : memref<1024xf32, #tpu.memory_space<any>>) dst(%11 : memref<1024xf32, #tpu.memory_space<any>>)
    return
  }
}

</mosaic_0001>

<llo_original>
// kernel: _sample_and_gather.1
$region0: #{_sample_and_gather.1}
  #allocation0 [shape = 'u32[]', space=smem, size = 0x4, offset = 0x4, fixed_abs, tag = 'smem constant byte address 0x4 - core index']
  #allocation1 [shape = 'u32[144,128]{1,0:T(1,128)}', space=vmem, size = 0x12000, scoped, tag = 'internal scratch']
  #allocation2 [shape = 's32[1]{0}', space=sflag, size = 0x4, scoped, tag = 'scratch operand']
  #allocation3 [shape = 's32[1]{0}', space=sflag, size = 0x4, scoped, tag = 'scoped memory for _sample_and_gather.1']
  #allocation4 [shape = 's32[1]{0:T(128)S(6)}', space=smem, size = 0x200, scoped, tag = 'prefetched SMEM operand 0']
  #allocation5 [shape = 's32[]', space=sflag, size = 0x4, offset = 0, fixed_abs, tag = 'sflag constant byte address 0x0 - dummy sync flag']
  %s0 = inlined_call_operand.<no memory space> [shape: s32[1], index: 0, kind: input, shape index: {}]
  %s1 = inlined_call_operand.vmem [shape: f32[64,1024], index: 1, kind: input, shape index: {}]
  %s2 = inlined_call_operand.vmem [shape: f32[1,1024], index: 2, kind: output, shape index: {}]
  %s3 = sld [smem:[#allocation0]]
  $region39: #{_sample_and_gather.1} parent=0
    _
  %s5 = ssub.s32 1, %s3
  %s6 = scalar_select 0, %s5, %s3
  %7 = sst [smem:[#allocation4]] %s0
  %s8 = sld [smem:[#allocation4]]
  %s9 = sshrl.u32 %s8, 3
  %s10 = sand.u32 %s8, 7
  %s11 = smul.u32 %s9, 64
  %s12 = sadd.s32 %s10, %s11
  %s13 = scalar_lea.vmem %s1, %s12
  %p15 = scmp.lt.u32.totalorder 1, 8
  %p16 = pneg %p15
  // Predicated region
  $region2: #{_sample_and_gather.1} parent=0 // pred_check
    _
  $region3: #{_sample_and_gather.1} parent=0 // pred_check_branch
    %18 = sbr.rel (%p15) target = $region5
  $region4: #{_sample_and_gather.1} parent=0 // pred_region
    %s47 = sand.u32 1, 7
    %p48 = scmp.eq.s32.totalorder %s47, 0
    %p49 = pneg %p48
    // Predicated region
    $region17: #{_sample_and_gather.1} parent=4 // pred_check
      _
    $region18: #{_sample_and_gather.1} parent=4 // pred_check_branch
      %51 = sbr.rel (%p48) target = $region20
    $region19: #{_sample_and_gather.1} parent=4 // pred_region
      %s52 = sand.u32 1, 7
      %s53 = ssub.s32 1, %s52
      %s54 = scalar_lea.vmem %s13, %s53
      %s55 = ssub.s32 1, %s52
      %s56 = scalar_lea.vmem %s2, %s55
      loop: start=0, step=1, limit=1
      $region21: #{_sample_and_gather.1} parent=19 // loop_pre_header
        _
      $region22: #{_sample_and_gather.1} parent=19 // loop_header
        %s58 = sphi 0, %s62
        %p59 = scmp.ge.s32.totalorder %s58, 1
        %s63 = sphi %s13, %s13
        %s64 = sphi %s2, %s2
      $region23: #{_sample_and_gather.1} parent=19 // loop_header_branch
        %61 = sbr.rel (%p59) target = $region27
      $region24: #{_sample_and_gather.1} parent=19 // loop_body
        _
      $region25: #{_sample_and_gather.1} parent=19 // loop_footer
        %s62 = sadd.s32 1, %s58
      $region26: #{_sample_and_gather.1} parent=19 // loop_footer_branch
        %57 = sbr.rel target = $region22
      $region27: #{_sample_and_gather.1} parent=19 // loop_exit
        _
      %s65 = sshllo.u32 0, %s52
      loop: start=0, step=1, limit=1
      $region28: #{_sample_and_gather.1} parent=19 // loop_pre_header
        _
      $region29: #{_sample_and_gather.1} parent=19 // loop_header
        %s67 = sphi 0, %s71
        %p68 = scmp.ge.s32.totalorder %s67, 1
        %s72 = sphi %s54, %s54
        %s73 = sphi %s56, %s56
      $region30: #{_sample_and_gather.1} parent=19 // loop_header_branch
        %70 = sbr.rel (%p68) target = $region34
      $region31: #{_sample_and_gather.1} parent=19 // loop_body
        %v74 = vld [vmem:[%s72] sm:%s65]
        %75 = vst [vmem:[%s73] sm:%s65] %v74
        %v76 = vld [vmem:[%s72 + $0x8] sm:%s65]
        %77 = vst [vmem:[%s73 + $0x1] sm:%s65] %v76
        %v78 = vld [vmem:[%s72 + $0x10] sm:%s65]
        %79 = vst [vmem:[%s73 + $0x2] sm:%s65] %v78
        %v80 = vld [vmem:[%s72 + $0x18] sm:%s65]
        %81 = vst [vmem:[%s73 + $0x3] sm:%s65] %v80
        %v82 = vld [vmem:[%s72 + $0x20] sm:%s65]
        %83 = vst [vmem:[%s73 + $0x4] sm:%s65] %v82
        %v84 = vld [vmem:[%s72 + $0x28] sm:%s65]
        %85 = vst [vmem:[%s73 + $0x5] sm:%s65] %v84
        %v86 = vld [vmem:[%s72 + $0x30] sm:%s65]
        %87 = vst [vmem:[%s73 + $0x6] sm:%s65] %v86
        %v88 = vld [vmem:[%s72 + $0x38] sm:%s65]
        %89 = vst [vmem:[%s73 + $0x7] sm:%s65] %v88
      $region32: #{_sample_and_gather.1} parent=19 // loop_footer
        %s71 = sadd.s32 1, %s67
      $region33: #{_sample_and_gather.1} parent=19 // loop_footer_branch
        %66 = sbr.rel target = $region29
      $region34: #{_sample_and_gather.1} parent=19 // loop_exit
        _
    $region20: #{_sample_and_gather.1} parent=4 // pred_fallthru
      _
  $region5: #{_sample_and_gather.1} parent=0 // pred_fallthru
    _
  // Predicated region
  $region6: #{_sample_and_gather.1} parent=0 // pred_check
    %p19 = pneg %p15
  $region7: #{_sample_and_gather.1} parent=0 // pred_check_branch
    %21 = sbr.rel (%p19) target = $region9
  $region8: #{_sample_and_gather.1} parent=0 // pred_region
    %s22 = sshllo.u32 0, 1
    loop: start=0, step=1, limit=1
    $region10: #{_sample_and_gather.1} parent=8 // loop_pre_header
      _
    $region11: #{_sample_and_gather.1} parent=8 // loop_header
      %s24 = sphi 0, %s28
      %p25 = scmp.ge.s32.totalorder %s24, 1
      %s29 = sphi %s13, %s13
      %s30 = sphi %s2, %s2
    $region12: #{_sample_and_gather.1} parent=8 // loop_header_branch
      %27 = sbr.rel (%p25) target = $region16
    $region13: #{_sample_and_gather.1} parent=8 // loop_body
      %v31 = vld [vmem:[%s29] sm:%s22]
      %32 = vst [vmem:[%s30] sm:%s22] %v31
      %v33 = vld [vmem:[%s29 + $0x8] sm:%s22]
      %34 = vst [vmem:[%s30 + $0x1] sm:%s22] %v33
      %v35 = vld [vmem:[%s29 + $0x10] sm:%s22]
      %36 = vst [vmem:[%s30 + $0x2] sm:%s22] %v35
      %v37 = vld [vmem:[%s29 + $0x18] sm:%s22]
      %38 = vst [vmem:[%s30 + $0x3] sm:%s22] %v37
      %v39 = vld [vmem:[%s29 + $0x20] sm:%s22]
      %40 = vst [vmem:[%s30 + $0x4] sm:%s22] %v39
      %v41 = vld [vmem:[%s29 + $0x28] sm:%s22]
      %42 = vst [vmem:[%s30 + $0x5] sm:%s22] %v41
      %v43 = vld [vmem:[%s29 + $0x30] sm:%s22]
      %44 = vst [vmem:[%s30 + $0x6] sm:%s22] %v43
      %v45 = vld [vmem:[%s29 + $0x38] sm:%s22]
      %46 = vst [vmem:[%s30 + $0x7] sm:%s22] %v45
    $region14: #{_sample_and_gather.1} parent=8 // loop_footer
      %s28 = sadd.s32 1, %s24
    $region15: #{_sample_and_gather.1} parent=8 // loop_footer_branch
      %23 = sbr.rel target = $region11
    $region16: #{_sample_and_gather.1} parent=8 // loop_exit
      _
  $region9: #{_sample_and_gather.1} parent=0 // pred_fallthru
    _
  // Predicated region
  $region35: #{_sample_and_gather.1} parent=0 // pred_check
    _
  $region36: #{_sample_and_gather.1} parent=0 // pred_check_branch
    %92 = sbr.rel (0) target = $region38
  $region37: #{_sample_and_gather.1} parent=0 // pred_region
    %93 = vsyncadd [#allocation2], 128
  $region38: #{_sample_and_gather.1} parent=0 // pred_fallthru
    _
  %s94 = sld [smem:[#allocation4]]
  %96 = dma.done [#allocation2], 128
  %97 = vsyncmov [#allocation2]
  %s98 = vpop.sfrf %97
  %p99 = scmp.eq.s32.totalorder %s98, 0
  %p100 = pneg %p99
  %102 = shalt.err (%p100)

</llo_original>
